<compile_context>
chip_gen: v7x
topology: tpu7x:2x2x1
jax: 0.10.0
libtpu: 0.0.40
codegen_flags: <defaults>
</compile_context>

<pallas_src>
import jax
import jax.numpy as jnp
from jax.experimental import pallas as pl
from jax.experimental.pallas import tpu as pltpu

N_STATE = 4        # CartPole-v1 observation dim (fc1 in_features)
N_HIDDEN = 256     # fc1 out_features / fc2 in_features
N_ACTIONS = 2      # CartPole-v1 action space (fc2 out_features)
TB_MAX = 2048      # max batch rows per grid step (VMEM is a non-issue at this size)


def qnet_kernel(x_ref, w1_ref, b1_ref, w2_ref, b2_ref, o_ref):
    """Fused fc1 -> ReLU -> fc2 for one (tb, ...) batch tile."""
    x = x_ref[...]                       # (tb, 4)   f32
    w1 = w1_ref[...]                     # (4, 256)  f32

    # fc1 on the VPU: h = b1 + sum_k x[:, k] * w1[k, :]  (K=4 -> 4 broadcast FMAs,
    # with the bias folded into the first one).
    h = b1_ref[...] + x[:, 0:1] * w1[0:1, :]
    for k in range(1, N_STATE):          # static unroll, N_STATE = 4
        h = h + x[:, k:k + 1] * w1[k:k + 1, :]
    h = jnp.maximum(h, 0.0)              # ReLU

    # fc2 on the MXU: (tb, 256) @ (256, 2), f32 accumulation.
    out = jnp.dot(h.astype(w2_ref.dtype), w2_ref[...],
                  preferred_element_type=jnp.float32)
    o_ref[...] = (out + b2_ref[...]).astype(o_ref.dtype)   # (1, 2) broadcast add


def _round_up(n, m):
    return ((n + m - 1) // m) * m


def _tensorcores_per_chip():
    """Best-effort TensorCore-per-device count (v7x / megacore -> 2)."""
    try:
        kind = jax.devices()[0].device_kind.lower()
        if any(tag in kind for tag in ("v7", "v4", "v5p")):
            return 2
    except Exception:
        pass
    return 1


def qnet_forward(x, w1, b1, w2, b2, *, mxu_dtype=jnp.bfloat16, tb=None):
    """QNet forward: relu(x @ w1 + b1) @ w2 + b2  -> (B, N_ACTIONS) float32."""
    B = x.shape[0]

    if tb is None:
        cores = _tensorcores_per_chip()
        if cores > 1 and B >= 256:
            # Multi-TC chips: >= 2 balanced grid steps so the "parallel" batch
            # axis can be sharded across TensorCores.
            tb = min(TB_MAX, _round_up(pl.cdiv(B, cores), 8))
        else:
            # Single-TC chips (v5e/v6e): minimize grid steps (each step costs
            # ~0.35 us of pipeline overhead, comparable to the DMA here).
            tb = min(B, TB_MAX)
    grid = (pl.cdiv(B, tb),)

    # fc2 MXU operand dtype (bf16 is MXU-native on all generations; the (256, 2)
    # cast is ~1 KiB and gets folded/hoisted by XLA under jit).
    w2_c = w2.astype(mxu_dtype)

    itemsize = jnp.dtype(mxu_dtype).itemsize
    cost = pl.CostEstimate(
        flops=2 * B * (N_STATE * N_HIDDEN + N_HIDDEN * N_ACTIONS),
        transcendentals=0,
        bytes_accessed=(B * N_STATE * 4 + N_STATE * N_HIDDEN * 4 + N_HIDDEN * 4
                        + N_HIDDEN * N_ACTIONS * itemsize + N_ACTIONS * 4
                        + B * N_ACTIONS * 4),
    )

    return pl.pallas_call(
        qnet_kernel,
        out_shape=jax.ShapeDtypeStruct((B, N_ACTIONS), jnp.float32),
        grid=grid,
        in_specs=[
            pl.BlockSpec((tb, N_STATE), lambda i: (i, 0)),            # x tile
            pl.BlockSpec((N_STATE, N_HIDDEN), lambda i: (0, 0)),      # w1 resident
            pl.BlockSpec((1, N_HIDDEN), lambda i: (0, 0)),            # b1 resident
            pl.BlockSpec((N_HIDDEN, N_ACTIONS), lambda i: (0, 0)),    # w2 resident
            pl.BlockSpec((1, N_ACTIONS), lambda i: (0, 0)),           # b2 resident
        ],
        out_specs=pl.BlockSpec((tb, N_ACTIONS), lambda i: (i, 0)),
        compiler_params=pltpu.CompilerParams(
            # No reduction axis -> the batch axis is safe to shard across
            # TensorCores on multi-TC chips.
            dimension_semantics=("parallel",)),
        cost_estimate=cost,
    )(x, w1, b1, w2_c, b2)


def init_params(key):
    # Deterministic synthetic parameters (PyTorch-Linear-like uniform init).
    k1, k2, k3, k4 = jax.random.split(key, 4)
    bound1 = 1.0 / jnp.sqrt(N_STATE)
    bound2 = 1.0 / jnp.sqrt(N_HIDDEN)
    # Stored as (in, out): equivalent to PyTorch weight.T
    w1 = jax.random.uniform(k1, (N_STATE, N_HIDDEN), jnp.float32, -bound1, bound1)
    b1 = jax.random.uniform(k2, (1, N_HIDDEN), jnp.float32, -bound1, bound1)
    w2 = jax.random.uniform(k3, (N_HIDDEN, N_ACTIONS), jnp.float32, -bound2, bound2)
    b2 = jax.random.uniform(k4, (1, N_ACTIONS), jnp.float32, -bound2, bound2)
    return w1, b1, w2, b2


def qnet_reference(x, w1, b1, w2, b2):
    h = jnp.maximum(x @ w1 + b1, 0.0)
    return h @ w2 + b2


if __name__ == "__main__":
    key = jax.random.PRNGKey(0)
    kx, kp = jax.random.split(key)
    w1, b1, w2, b2 = init_params(kp)

    # 1) f32 MXU path, single full tile -> bit-comparable to the f32 reference.
    x8 = jax.random.normal(kx, (8, N_STATE), jnp.float32)
    out8 = jax.block_until_ready(
        qnet_forward(x8, w1, b1, w2, b2, mxu_dtype=jnp.float32))
    ref8 = qnet_reference(x8, w1, b1, w2, b2)
    assert out8.shape == (8, N_ACTIONS)
    assert jnp.allclose(out8, ref8, atol=1e-4, rtol=1e-4)

    # 2) Default bf16 fc2 operands + non-multiple batch (20 rows, tb=8 -> grid
    #    of 3 with a partial last tile) to guard the boundary-masking path.
    x20 = jax.random.normal(kx, (20, N_STATE), jnp.float32)
    out20 = jax.block_until_ready(qnet_forward(x20, w1, b1, w2, b2, tb=8))
    ref20 = qnet_reference(x20, w1, b1, w2, b2)
    assert out20.shape == (20, N_ACTIONS)
    assert jnp.allclose(out20, ref20, atol=5e-2, rtol=5e-2)  # bf16 fc2 tolerance

    print("KERNEL_OK")
</pallas_src>

<mosaic_0001>
module attributes {stable_mosaic.version = 11 : i64} {
  func.func @qnet_kernel(%arg0: i32, %arg1: memref<8x4xf32, #tpu.memory_space<vmem>>, %arg2: memref<4x256xf32, #tpu.memory_space<vmem>>, %arg3: memref<1x256xf32, #tpu.memory_space<vmem>>, %arg4: memref<256x2xf32, #tpu.memory_space<vmem>>, %arg5: memref<1x2xf32, #tpu.memory_space<vmem>>, %arg6: memref<8x2xf32, #tpu.memory_space<vmem>>) attributes {dimension_semantics = [#tpu.dimension_semantics<parallel>], iteration_bounds = array<i64: 1>, scalar_prefetch = 0 : i64, scratch_operands = 0 : i64, tpu.core_type = #tpu.core_type<tc>, window_params = [{transform_indices = @transform_0, window_bounds = array<i64: 8, 4>}, {pipeline_mode = #tpu.pipeline_mode<synchronous>, transform_indices = @transform_1, window_bounds = array<i64: 4, 256>}, {pipeline_mode = #tpu.pipeline_mode<synchronous>, transform_indices = @transform_2, window_bounds = array<i64: 1, 256>}, {pipeline_mode = #tpu.pipeline_mode<synchronous>, transform_indices = @transform_3, window_bounds = array<i64: 256, 2>}, {pipeline_mode = #tpu.pipeline_mode<synchronous>, transform_indices = @transform_4, window_bounds = array<i64: 1, 2>}, {transform_indices = @transform_5, window_bounds = array<i64: 8, 2>}]} {
    %c0 = arith.constant 0 : index
    %c0_0 = arith.constant 0 : index
    %0 = vector.load %arg1[%c0, %c0_0] : memref<8x4xf32, #tpu.memory_space<vmem>>, vector<8x4xf32>
    %c0_1 = arith.constant 0 : index
    %c0_2 = arith.constant 0 : index
    %1 = vector.load %arg2[%c0_1, %c0_2] : memref<4x256xf32, #tpu.memory_space<vmem>>, vector<4x256xf32>
    %c0_3 = arith.constant 0 : index
    %c0_4 = arith.constant 0 : index
    %2 = vector.load %arg3[%c0_3, %c0_4] : memref<1x256xf32, #tpu.memory_space<vmem>>, vector<1x256xf32>
    %3 = vector.extract_strided_slice %0 {offsets = [0, 0], sizes = [8, 1], strides = [1, 1]} : vector<8x4xf32> to vector<8x1xf32>
    %4 = vector.extract_strided_slice %1 {offsets = [0, 0], sizes = [1, 256], strides = [1, 1]} : vector<4x256xf32> to vector<1x256xf32>
    %5 = vector.broadcast %3 : vector<8x1xf32> to vector<8x256xf32>
    %6 = vector.broadcast %4 : vector<1x256xf32> to vector<8x256xf32>
    %7 = arith.mulf %5, %6 : vector<8x256xf32>
    %8 = vector.broadcast %2 : vector<1x256xf32> to vector<8x256xf32>
    %9 = arith.addf %8, %7 : vector<8x256xf32>
    %10 = vector.extract_strided_slice %0 {offsets = [0, 1], sizes = [8, 1], strides = [1, 1]} : vector<8x4xf32> to vector<8x1xf32>
    %11 = vector.extract_strided_slice %1 {offsets = [1, 0], sizes = [1, 256], strides = [1, 1]} : vector<4x256xf32> to vector<1x256xf32>
    %12 = vector.broadcast %10 : vector<8x1xf32> to vector<8x256xf32>
    %13 = vector.broadcast %11 : vector<1x256xf32> to vector<8x256xf32>
    %14 = arith.mulf %12, %13 : vector<8x256xf32>
    %15 = arith.addf %9, %14 : vector<8x256xf32>
    %16 = vector.extract_strided_slice %0 {offsets = [0, 2], sizes = [8, 1], strides = [1, 1]} : vector<8x4xf32> to vector<8x1xf32>
    %17 = vector.extract_strided_slice %1 {offsets = [2, 0], sizes = [1, 256], strides = [1, 1]} : vector<4x256xf32> to vector<1x256xf32>
    %18 = vector.broadcast %16 : vector<8x1xf32> to vector<8x256xf32>
    %19 = vector.broadcast %17 : vector<1x256xf32> to vector<8x256xf32>
    %20 = arith.mulf %18, %19 : vector<8x256xf32>
    %21 = arith.addf %15, %20 : vector<8x256xf32>
    %22 = vector.extract_strided_slice %0 {offsets = [0, 3], sizes = [8, 1], strides = [1, 1]} : vector<8x4xf32> to vector<8x1xf32>
    %23 = vector.extract_strided_slice %1 {offsets = [3, 0], sizes = [1, 256], strides = [1, 1]} : vector<4x256xf32> to vector<1x256xf32>
    %24 = vector.broadcast %22 : vector<8x1xf32> to vector<8x256xf32>
    %25 = vector.broadcast %23 : vector<1x256xf32> to vector<8x256xf32>
    %26 = arith.mulf %24, %25 : vector<8x256xf32>
    %27 = arith.addf %21, %26 : vector<8x256xf32>
    %cst = arith.constant 0.000000e+00 : f32
    %28 = vector.broadcast %cst : f32 to vector<8x256xf32>
    %29 = arith.maximumf %27, %28 : vector<8x256xf32>
    %c0_5 = arith.constant 0 : index
    %c0_6 = arith.constant 0 : index
    %30 = vector.load %arg4[%c0_5, %c0_6] : memref<256x2xf32, #tpu.memory_space<vmem>>, vector<256x2xf32>
    %cst_7 = arith.constant dense<0.000000e+00> : vector<8x2xf32>
    %31 = tpu.matmul %29, %30, %cst_7 {dimension_numbers = #tpu.dot_dimension_numbers<[1], [0], [0], [1], [0, 0, 1, 1], [], []>} : vector<8x256xf32>, vector<256x2xf32>, vector<8x2xf32> -> vector<8x2xf32>
    %c0_8 = arith.constant 0 : index
    %c0_9 = arith.constant 0 : index
    %32 = vector.load %arg5[%c0_8, %c0_9] : memref<1x2xf32, #tpu.memory_space<vmem>>, vector<1x2xf32>
    %33 = vector.broadcast %32 : vector<1x2xf32> to vector<8x2xf32>
    %34 = arith.addf %31, %33 : vector<8x2xf32>
    %c0_10 = arith.constant 0 : index
    %c0_11 = arith.constant 0 : index
    %35 = vector.load %arg6[%c0_10, %c0_11] : memref<8x2xf32, #tpu.memory_space<vmem>>, vector<8x2xf32>
    tpu.vector_store %arg6[%c0_10, %c0_11], %34 {strides = array<i32>} : memref<8x2xf32, #tpu.memory_space<vmem>>, vector<8x2xf32>,
    return
  }
  func.func @transform_0(%arg0: i32) -> (i32, i32) {
    %c0_i32 = arith.constant 0 : i32
    %c0_i32_0 = arith.constant 0 : i32
    return %arg0, %c0_i32 : i32, i32
  }
  func.func @transform_1(%arg0: i32) -> (i32, i32) {
    %c0_i32 = arith.constant 0 : i32
    %c0_i32_0 = arith.constant 0 : i32
    %c0_i32_1 = arith.constant 0 : i32
    return %c0_i32, %c0_i32_0 : i32, i32
  }
  func.func @transform_2(%arg0: i32) -> (i32, i32) {
    %c0_i32 = arith.constant 0 : i32
    %c0_i32_0 = arith.constant 0 : i32
    %c0_i32_1 = arith.constant 0 : i32
    return %c0_i32, %c0_i32_0 : i32, i32
  }
  func.func @transform_3(%arg0: i32) -> (i32, i32) {
    %c0_i32 = arith.constant 0 : i32
    %c0_i32_0 = arith.constant 0 : i32
    %c0_i32_1 = arith.constant 0 : i32
    return %c0_i32, %c0_i32_0 : i32, i32
  }
  func.func @transform_4(%arg0: i32) -> (i32, i32) {
    %c0_i32 = arith.constant 0 : i32
    %c0_i32_0 = arith.constant 0 : i32
    %c0_i32_1 = arith.constant 0 : i32
    return %c0_i32, %c0_i32_0 : i32, i32
  }
  func.func @transform_5(%arg0: i32) -> (i32, i32) {
    %c0_i32 = arith.constant 0 : i32
    %c0_i32_0 = arith.constant 0 : i32
    return %arg0, %c0_i32 : i32, i32
  }
}

</mosaic_0001>

<llo_original>
// kernel: tpu_custom_call.1
$region0: #{tpu_custom_call.1}
  #allocation0 [shape = 'u32[]', space=smem, size = 0x4, offset = 0x4, fixed_abs, tag = 'smem constant byte address 0x4 - core index']
  #allocation1 [shape = 'u32[144,128]{1,0:T(1,128)}', space=vmem, size = 0x12000, scoped, tag = 'internal scratch']
  %s0 = inlined_call_operand.vmem [shape: f32[8,4], index: 0, kind: input, shape index: {}]
  %s1 = inlined_call_operand.vmem [shape: f32[4,256], index: 1, kind: input, shape index: {}]
  %s2 = inlined_call_operand.vmem [shape: f32[1,256], index: 2, kind: input, shape index: {}]
  %s3 = inlined_call_operand.vmem [shape: f32[256,2], index: 3, kind: input, shape index: {}]
  %s4 = inlined_call_operand.vmem [shape: f32[1,2], index: 4, kind: input, shape index: {}]
  %s5 = inlined_call_operand.vmem [shape: f32[8,2], index: 5, kind: output, shape index: {}]
  %s6 = sld [smem:[#allocation0]]
  $region30: #{tpu_custom_call.1} parent=0
    _
  %s8 = ssub.s32 1, %s6
  %s9 = scalar_select 0, %s8, %s6
  // Predicated region
  $region2: #{tpu_custom_call.1} parent=0 // pred_check
    _
  $region3: #{tpu_custom_call.1} parent=0 // pred_check_branch
    %11 = sbr.rel (0) target = $region5
  $region4: #{tpu_custom_call.1} parent=0 // pred_region
    _
  $region5: #{tpu_custom_call.1} parent=0 // pred_fallthru
    _
  // Predicated region
  $region6: #{tpu_custom_call.1} parent=0 // pred_check
    _
  $region7: #{tpu_custom_call.1} parent=0 // pred_check_branch
    %13 = sbr.rel (0) target = $region9
  $region8: #{tpu_custom_call.1} parent=0 // pred_region
    _
  $region9: #{tpu_custom_call.1} parent=0 // pred_fallthru
    _
  // Predicated region
  $region10: #{tpu_custom_call.1} parent=0 // pred_check
    _
  $region11: #{tpu_custom_call.1} parent=0 // pred_check_branch
    %15 = sbr.rel (0) target = $region13
  $region12: #{tpu_custom_call.1} parent=0 // pred_region
    _
  $region13: #{tpu_custom_call.1} parent=0 // pred_fallthru
    _
  // Predicated region
  $region14: #{tpu_custom_call.1} parent=0 // pred_check
    _
  $region15: #{tpu_custom_call.1} parent=0 // pred_check_branch
    %17 = sbr.rel (0) target = $region17
  $region16: #{tpu_custom_call.1} parent=0 // pred_region
    _
  $region17: #{tpu_custom_call.1} parent=0 // pred_fallthru
    _
  // Predicated region
  $region18: #{tpu_custom_call.1} parent=0 // pred_check
    _
  $region19: #{tpu_custom_call.1} parent=0 // pred_check_branch
    %19 = sbr.rel (0) target = $region21
  $region20: #{tpu_custom_call.1} parent=0 // pred_region
    _
  $region21: #{tpu_custom_call.1} parent=0 // pred_fallthru
    _
  %v20 = vld [vmem:[%s0] sm:$0xff]
  %v21 = vld [vmem:[%s1] sm:$0xff]
  %v22 = vld [vmem:[%s2] sm:$0x3]
  %24 = vset.pattern.permute.xlu0 0
  %25 = vperm.xlu0 %24, %v20
  %v26 = vpop.permute.xlu0 %25
  %v29 = vlaneseq
  %v30 = vshrl.u32 %v29, 7
  %v31 = vsub.s32 0, %v30
  %v32 = vrot.slane %v21, %v31
  %v33 = vlaneseq
  %v34 = vshrl.u32 %v33, 7
  %v35 = vsub.s32 4, %v34
  %v36 = vrot.slane %v21, %v35
  %v39 = vlaneseq
  %v40 = vshrl.u32 %v39, 7
  %v41 = vsub.s32 0, %v40
  %v42 = vrot.slane %v32, %v41
  %v43 = vlaneseq
  %v44 = vshrl.u32 %v43, 7
  %v45 = vsub.s32 0, %v44
  %v46 = vrot.slane %v36, %v45
  %v47 = vmul.f32 %v26, %v42
  %v48 = vmul.f32 %v26, %v46
  %v50 = vlaneseq
  %v51 = vshrl.u32 %v50, 7
  %v52 = vsub.s32 0, %v51
  %v53 = vrot.slane %v22, %v52
  %v54 = vlaneseq
  %v55 = vshrl.u32 %v54, 7
  %v56 = vsub.s32 1, %v55
  %v57 = vrot.slane %v22, %v56
  %v60 = vadd.f32 %v53, %v47
  %v61 = vadd.f32 %v57, %v48
  %62 = vset.pattern.permute.xlu0 1
  %63 = vperm.xlu0 %62, %v20
  %v64 = vpop.permute.xlu0 %63
  %v66 = vlaneseq
  %v67 = vshrl.u32 %v66, 7
  %v68 = vsub.s32 1, %v67
  %v69 = vrot.slane %v21, %v68
  %v70 = vlaneseq
  %v71 = vshrl.u32 %v70, 7
  %v72 = vsub.s32 5, %v71
  %v73 = vrot.slane %v21, %v72
  %v76 = vlaneseq
  %v77 = vshrl.u32 %v76, 7
  %v78 = vsub.s32 1, %v77
  %v79 = vrot.slane %v69, %v78
  %v80 = vlaneseq
  %v81 = vshrl.u32 %v80, 7
  %v82 = vsub.s32 1, %v81
  %v83 = vrot.slane %v73, %v82
  %v84 = vmul.f32 %v64, %v79
  %v85 = vmul.f32 %v64, %v83
  %v86 = vadd.f32 %v60, %v84
  %v87 = vadd.f32 %v61, %v85
  %88 = vset.pattern.permute.xlu0 2
  %89 = vperm.xlu0 %88, %v20
  %v90 = vpop.permute.xlu0 %89
  %v92 = vlaneseq
  %v93 = vshrl.u32 %v92, 7
  %v94 = vsub.s32 2, %v93
  %v95 = vrot.slane %v21, %v94
  %v96 = vlaneseq
  %v97 = vshrl.u32 %v96, 7
  %v98 = vsub.s32 6, %v97
  %v99 = vrot.slane %v21, %v98
  %v102 = vlaneseq
  %v103 = vshrl.u32 %v102, 7
  %v104 = vsub.s32 2, %v103
  %v105 = vrot.slane %v95, %v104
  %v106 = vlaneseq
  %v107 = vshrl.u32 %v106, 7
  %v108 = vsub.s32 2, %v107
  %v109 = vrot.slane %v99, %v108
  %v110 = vmul.f32 %v90, %v105
  %v111 = vmul.f32 %v90, %v109
  %v112 = vadd.f32 %v86, %v110
  %v113 = vadd.f32 %v87, %v111
  %114 = vset.pattern.permute.xlu0 3
  %115 = vperm.xlu0 %114, %v20
  %v116 = vpop.permute.xlu0 %115
  %v118 = vlaneseq
  %v119 = vshrl.u32 %v118, 7
  %v120 = vsub.s32 3, %v119
  %v121 = vrot.slane %v21, %v120
  %v122 = vlaneseq
  %v123 = vshrl.u32 %v122, 7
  %v124 = vsub.s32 7, %v123
  %v125 = vrot.slane %v21, %v124
  %v128 = vlaneseq
  %v129 = vshrl.u32 %v128, 7
  %v130 = vsub.s32 3, %v129
  %v131 = vrot.slane %v121, %v130
  %v132 = vlaneseq
  %v133 = vshrl.u32 %v132, 7
  %v134 = vsub.s32 3, %v133
  %v135 = vrot.slane %v125, %v134
  %v136 = vmul.f32 %v116, %v131
  %v137 = vmul.f32 %v116, %v135
  %v138 = vadd.f32 %v112, %v136
  %v139 = vadd.f32 %v113, %v137
  %v140 = vmax.f32 %v138, 0.0
  %v141 = vmax.f32 %v139, 0.0
  %v142 = vld [vmem:[%s3] sm:$0xff]
  %v143 = vld [vmem:[%s3 + $0x8] sm:$0xff]
  %v144 = vld [vmem:[%s3 + $0x10] sm:$0xff]
  %v145 = vld [vmem:[%s3 + $0x18] sm:$0xff]
  %v146 = vld [vmem:[%s3 + $0x20] sm:$0xff]
  %v147 = vld [vmem:[%s3 + $0x28] sm:$0xff]
  %v148 = vld [vmem:[%s3 + $0x30] sm:$0xff]
  %v149 = vld [vmem:[%s3 + $0x38] sm:$0xff]
  %v150 = vld [vmem:[%s3 + $0x40] sm:$0xff]
  %v151 = vld [vmem:[%s3 + $0x48] sm:$0xff]
  %v152 = vld [vmem:[%s3 + $0x50] sm:$0xff]
  %v153 = vld [vmem:[%s3 + $0x58] sm:$0xff]
  %v154 = vld [vmem:[%s3 + $0x60] sm:$0xff]
  %v155 = vld [vmem:[%s3 + $0x68] sm:$0xff]
  %v156 = vld [vmem:[%s3 + $0x70] sm:$0xff]
  %v157 = vld [vmem:[%s3 + $0x78] sm:$0xff]
  %v158 = vld [vmem:[%s3 + $0x80] sm:$0xff]
  %v159 = vld [vmem:[%s3 + $0x88] sm:$0xff]
  %v160 = vld [vmem:[%s3 + $0x90] sm:$0xff]
  %v161 = vld [vmem:[%s3 + $0x98] sm:$0xff]
  %v162 = vld [vmem:[%s3 + $0xa0] sm:$0xff]
  %v163 = vld [vmem:[%s3 + $0xa8] sm:$0xff]
  %v164 = vld [vmem:[%s3 + $0xb0] sm:$0xff]
  %v165 = vld [vmem:[%s3 + $0xb8] sm:$0xff]
  %v166 = vld [vmem:[%s3 + $0xc0] sm:$0xff]
  %v167 = vld [vmem:[%s3 + $0xc8] sm:$0xff]
  %v168 = vld [vmem:[%s3 + $0xd0] sm:$0xff]
  %v169 = vld [vmem:[%s3 + $0xd8] sm:$0xff]
  %v170 = vld [vmem:[%s3 + $0xe0] sm:$0xff]
  %v171 = vld [vmem:[%s3 + $0xe8] sm:$0xff]
  %v172 = vld [vmem:[%s3 + $0xf0] sm:$0xff]
  %v173 = vld [vmem:[%s3 + $0xf8] sm:$0xff]
  %v174 = vld [vmem:[%s4] sm:$0x1]
  %v176 = vlaneseq
  %v177 = vshrl.u32 %v176, 7
  %v178 = vsub.s32 0, %v177
  %v179 = vrot.slane %v174, %v178
  %181 = vmatprep.subr.mxu0 0.0
  %182 = vmatpush1.msra.mxu0 %v142
  %183 = vmatprep.subr.mxu0 0.0
  %184 = vmatpush1.msra.mxu0 %v143
  %185 = vmatprep.subr.mxu0 0.0
  %186 = vmatpush1.msra.mxu0 %v144
  %187 = vmatprep.subr.mxu0 0.0
  %188 = vmatpush1.msra.mxu0 %v145
  %189 = vmatprep.subr.mxu0 0.0
  %190 = vmatpush1.msra.mxu0 %v146
  %191 = vmatprep.subr.mxu0 0.0
  %192 = vmatpush1.msra.mxu0 %v147
  %193 = vmatprep.subr.mxu0 0.0
  %194 = vmatpush1.msra.mxu0 %v148
  %195 = vmatprep.subr.mxu0 0.0
  %196 = vmatpush1.msra.mxu0 %v149
  %197 = vmatprep.subr.mxu0 0.0
  %198 = vmatpush1.msra.mxu0 %v150
  %199 = vmatprep.subr.mxu0 0.0
  %200 = vmatpush1.msra.mxu0 %v151
  %201 = vmatprep.subr.mxu0 0.0
  %202 = vmatpush1.msra.mxu0 %v152
  %203 = vmatprep.subr.mxu0 0.0
  %204 = vmatpush1.msra.mxu0 %v153
  %205 = vmatprep.subr.mxu0 0.0
  %206 = vmatpush1.msra.mxu0 %v154
  %207 = vmatprep.subr.mxu0 0.0
  %208 = vmatpush1.msra.mxu0 %v155
  %209 = vmatprep.subr.mxu0 0.0
  %210 = vmatpush1.msra.mxu0 %v156
  %211 = vmatprep.subr.mxu0 0.0
  %212 = vmatpush1.msra.mxu0 %v157
  %213 = vmatprep.subr.mxu0 0.0
  %214 = vmatpush1.msra.mxu0 %v158
  %215 = vmatprep.subr.mxu0 0.0
  %216 = vmatpush1.msra.mxu0 %v159
  %217 = vmatprep.subr.mxu0 0.0
  %218 = vmatpush1.msra.mxu0 %v160
  %219 = vmatprep.subr.mxu0 0.0
  %220 = vmatpush1.msra.mxu0 %v161
  %221 = vmatprep.subr.mxu0 0.0
  %222 = vmatpush1.msra.mxu0 %v162
  %223 = vmatprep.subr.mxu0 0.0
  %224 = vmatpush1.msra.mxu0 %v163
  %225 = vmatprep.subr.mxu0 0.0
  %226 = vmatpush1.msra.mxu0 %v164
  %227 = vmatprep.subr.mxu0 0.0
  %228 = vmatpush1.msra.mxu0 %v165
  %229 = vmatprep.subr.mxu0 0.0
  %230 = vmatpush1.msra.mxu0 %v166
  %231 = vmatprep.subr.mxu0 0.0
  %232 = vmatpush1.msra.mxu0 %v167
  %233 = vmatprep.subr.mxu0 0.0
  %234 = vmatpush1.msra.mxu0 %v168
  %235 = vmatprep.subr.mxu0 0.0
  %236 = vmatpush1.msra.mxu0 %v169
  %237 = vmatprep.subr.mxu0 0.0
  %238 = vmatpush1.msra.mxu0 %v170
  %239 = vmatprep.subr.mxu0 0.0
  %240 = vmatpush1.msra.mxu0 %v171
  %241 = vmatprep.subr.mxu0 0.0
  %242 = vmatpush1.msra.mxu0 %v172
  %243 = vmatprep.subr.mxu0 0.0
  %244 = vmatpush1.msra.mxu0 %v173
  %245 = vmatprep.mubr.f32.mxu0 %v141
  %246 = vmatmul.mubr.f32.gmra.mrb[0].mxu0 %v140
  %v247 = vpop.f32.mrb[0].mxu0
  %v248 = vadd.f32 %v179, %v247
  %v249 = vpop.f32.mrb[0].mxu0
  %250 = vdwg.mxu0
  %vm251 = vcmask 15360
  %252 = vst.msk [vmem:[%s5] sm:$0xff] %vm251, %v248
  // Predicated region
  $region22: #{tpu_custom_call.1} parent=0 // pred_check
    _
  $region23: #{tpu_custom_call.1} parent=0 // pred_check_branch
    %254 = sbr.rel (0) target = $region25
  $region24: #{tpu_custom_call.1} parent=0 // pred_region
    _
  $region25: #{tpu_custom_call.1} parent=0 // pred_fallthru
    _
  // Predicated region
  $region26: #{tpu_custom_call.1} parent=0 // pred_check
    _
  $region27: #{tpu_custom_call.1} parent=0 // pred_check_branch
    %256 = sbr.rel (0) target = $region29
  $region28: #{tpu_custom_call.1} parent=0 // pred_region
    _
  $region29: #{tpu_custom_call.1} parent=0 // pred_fallthru
    _

</llo_original>
